<compile_context>
chip_gen: v5e
topology: v5e:2x2
jax: 0.10.0
libtpu: 0.0.40
codegen_flags: <defaults>
</compile_context>

<pallas_src>
import jax
import jax.numpy as jnp
from jax.experimental import pallas as pl
from jax.experimental.pallas import tpu as pltpu

_MAX_BATCH_TILE = 2048   # ~8 MiB double-buffered working set; fits every chip
_TC_SPLIT_MIN = 16       # only split across cores when each half has >=8 rows


def _round_up(v, m):
    return ((v + m - 1) // m) * m


def _policy_kernel(x_ref, w1_ref, b1_ref, w2m_ref, b2m_ref, w2v_ref, b2v_ref,
                   mu_ref, val_ref):
    # fc1 + ReLU (f32 accumulate on the MXU, elementwise on the VPU).
    h = jnp.dot(x_ref[...], w1_ref[...], preferred_element_type=jnp.float32)
    h = jnp.maximum(h + b1_ref[...], 0.0)
    # Two narrow heads: each output block's last dim is the full array dim, so
    # the stores are exactly as wide as the useful data (no 128-lane padding).
    mu_ref[...] = (
        jnp.dot(h, w2m_ref[...], preferred_element_type=jnp.float32)
        + b2m_ref[...]
    )
    val_ref[...] = (
        jnp.dot(h, w2v_ref[...], preferred_element_type=jnp.float32)
        + b2v_ref[...]
    )


def policy_forward(x, params):
    """Run the Policy forward pass. Returns (mu, sigma, value)."""
    w1, b1 = params["w1"], params["b1"]
    w2m, b2m = params["w2_mean"], params["b2_mean"]
    w2v, b2v = params["w2_value"], params["b2_value"]
    sigma = params["sigma"]

    batch, state_space = x.shape
    hidden = w1.shape[1]
    action = w2m.shape[1]

    # --- Batch tiling: at least two grid points once batch is non-tiny so the
    # "parallel" batch axis can shard across both TensorCores on v7x. ---------
    if batch < _TC_SPLIT_MIN:
        tile_b = batch                       # single block (full-dim block OK)
    else:
        tile_b = min(_MAX_BATCH_TILE, _round_up(pl.cdiv(batch, 2), 8))
    grid_b = pl.cdiv(batch, tile_b)          # ragged last block handled by
                                             # Pallas output-write masking.

    resident = lambda shape: pl.BlockSpec(shape, lambda i: (0, 0))

    cost = pl.CostEstimate(
        flops=2 * batch * (state_space * hidden + 2 * hidden * action),
        transcendentals=0,
        bytes_accessed=4 * (batch * state_space            # x read
                            + state_space * hidden + hidden
                            + 2 * (hidden * action + action)
                            + 2 * batch * action),          # mu + value write
    )

    mu, value = pl.pallas_call(
        _policy_kernel,
        out_shape=(jax.ShapeDtypeStruct((batch, action), jnp.float32),
                   jax.ShapeDtypeStruct((batch, action), jnp.float32)),
        grid=(grid_b,),
        in_specs=[
            pl.BlockSpec((tile_b, state_space), lambda i: (i, 0)),   # x tile
            resident((state_space, hidden)),                         # w1
            resident((1, hidden)),                                   # b1
            resident((hidden, action)),                              # w2_mean
            resident((1, action)),                                   # b2_mean
            resident((hidden, action)),                              # w2_value
            resident((1, action)),                                   # b2_value
        ],
        out_specs=[
            pl.BlockSpec((tile_b, action), lambda i: (i, 0)),        # mu
            pl.BlockSpec((tile_b, action), lambda i: (i, 0)),        # value
        ],
        compiler_params=pltpu.CompilerParams(
            dimension_semantics=("parallel",),
            vmem_limit_bytes=32 << 20),
        cost_estimate=cost,
    )(x, w1, b1, w2m, b2m, w2v, b2v)

    # Normal(mu, sigma): sigma is the (1,)-shaped learned parameter
    # (broadcasts against mu exactly as torch.distributions.Normal would).
    return mu, sigma, value


def init_policy_params(key, state_space, action_space, hidden=64):
    """Deterministic init mirroring Policy.init_weights():
       weights ~ N(0, 1), biases = 0, sigma = [10.0]."""
    k1, k2, k3 = jax.random.split(key, 3)
    # torch Linear weight is (out, in); we store the transpose (in, out).
    w1 = jax.random.normal(k1, (state_space, hidden), dtype=jnp.float32)
    w2m = jax.random.normal(k2, (hidden, action_space), dtype=jnp.float32)
    w2v = jax.random.normal(k3, (hidden, action_space), dtype=jnp.float32)
    return {
        "w1": w1,
        "b1": jnp.zeros((1, hidden), dtype=jnp.float32),
        "w2_mean": w2m,
        "b2_mean": jnp.zeros((1, action_space), dtype=jnp.float32),
        "w2_value": w2v,
        "b2_value": jnp.zeros((1, action_space), dtype=jnp.float32),
        "sigma": jnp.array([10.0], dtype=jnp.float32),
    }


def _reference_forward(x, params):
    h = jnp.maximum(x @ params["w1"] + params["b1"], 0.0)
    mu = h @ params["w2_mean"] + params["b2_mean"]
    value = h @ params["w2_value"] + params["b2_value"]
    return mu, params["sigma"], value


if __name__ == "__main__":
    key = jax.random.PRNGKey(0)
    kx, kp = jax.random.split(key)

    batch = 8
    state_space = 8
    action_space = 4

    x = jax.random.normal(kx, (batch, state_space), dtype=jnp.float32)
    params = init_policy_params(kp, state_space, action_space)

    mu, sigma, value = jax.block_until_ready(policy_forward(x, params))

    mu_ref, sigma_ref, value_ref = _reference_forward(x, params)
    assert mu.shape == (batch, action_space)
    assert value.shape == (batch, action_space)
    assert sigma.shape == (1,)
    assert jnp.allclose(mu, mu_ref, atol=1e-4, rtol=1e-4)
    assert jnp.allclose(value, value_ref, atol=1e-4, rtol=1e-4)
    assert jnp.allclose(sigma, sigma_ref)

    # Gridded large-batch path (multiple tiles + ragged last block).
    for big_batch in (1000, 2 * _MAX_BATCH_TILE + 8):
        xb = jax.random.normal(kx, (big_batch, state_space), dtype=jnp.float32)
        mu_b, _, val_b = jax.block_until_ready(policy_forward(xb, params))
        mu_br, _, val_br = _reference_forward(xb, params)
        assert mu_b.shape == (big_batch, action_space)
        assert jnp.allclose(mu_b, mu_br, atol=1e-4, rtol=1e-4)
        assert jnp.allclose(val_b, val_br, atol=1e-4, rtol=1e-4)

    print("KERNEL_OK")
</pallas_src>

<mosaic_0001>
module attributes {stable_mosaic.version = 11 : i64} {
  func.func @_policy_kernel(%arg0: i32, %arg1: memref<8x8xf32, #tpu.memory_space<vmem>>, %arg2: memref<8x64xf32, #tpu.memory_space<vmem>>, %arg3: memref<1x64xf32, #tpu.memory_space<vmem>>, %arg4: memref<64x4xf32, #tpu.memory_space<vmem>>, %arg5: memref<1x4xf32, #tpu.memory_space<vmem>>, %arg6: memref<64x4xf32, #tpu.memory_space<vmem>>, %arg7: memref<1x4xf32, #tpu.memory_space<vmem>>, %arg8: memref<8x4xf32, #tpu.memory_space<vmem>>, %arg9: memref<8x4xf32, #tpu.memory_space<vmem>>) attributes {dimension_semantics = [#tpu.dimension_semantics<parallel>], iteration_bounds = array<i64: 1>, scalar_prefetch = 0 : i64, scratch_operands = 0 : i64, tpu.core_type = #tpu.core_type<tc>, window_params = [{transform_indices = @transform_0, window_bounds = array<i64: 8, 8>}, {pipeline_mode = #tpu.pipeline_mode<synchronous>, transform_indices = @transform_1, window_bounds = array<i64: 8, 64>}, {pipeline_mode = #tpu.pipeline_mode<synchronous>, transform_indices = @transform_2, window_bounds = array<i64: 1, 64>}, {pipeline_mode = #tpu.pipeline_mode<synchronous>, transform_indices = @transform_3, window_bounds = array<i64: 64, 4>}, {pipeline_mode = #tpu.pipeline_mode<synchronous>, transform_indices = @transform_4, window_bounds = array<i64: 1, 4>}, {pipeline_mode = #tpu.pipeline_mode<synchronous>, transform_indices = @transform_5, window_bounds = array<i64: 64, 4>}, {pipeline_mode = #tpu.pipeline_mode<synchronous>, transform_indices = @transform_6, window_bounds = array<i64: 1, 4>}, {transform_indices = @transform_7, window_bounds = array<i64: 8, 4>}, {transform_indices = @transform_8, window_bounds = array<i64: 8, 4>}]} {
    %c0 = arith.constant 0 : index
    %c0_0 = arith.constant 0 : index
    %0 = vector.load %arg1[%c0, %c0_0] : memref<8x8xf32, #tpu.memory_space<vmem>>, vector<8x8xf32>
    %c0_1 = arith.constant 0 : index
    %c0_2 = arith.constant 0 : index
    %1 = vector.load %arg2[%c0_1, %c0_2] : memref<8x64xf32, #tpu.memory_space<vmem>>, vector<8x64xf32>
    %cst = arith.constant dense<0.000000e+00> : vector<8x64xf32>
    %2 = tpu.matmul %0, %1, %cst {dimension_numbers = #tpu.dot_dimension_numbers<[1], [0], [0], [1], [0, 0, 1, 1], [], []>} : vector<8x8xf32>, vector<8x64xf32>, vector<8x64xf32> -> vector<8x64xf32>
    %c0_3 = arith.constant 0 : index
    %c0_4 = arith.constant 0 : index
    %3 = vector.load %arg3[%c0_3, %c0_4] : memref<1x64xf32, #tpu.memory_space<vmem>>, vector<1x64xf32>
    %4 = vector.broadcast %3 : vector<1x64xf32> to vector<8x64xf32>
    %5 = arith.addf %2, %4 : vector<8x64xf32>
    %cst_5 = arith.constant 0.000000e+00 : f32
    %6 = vector.broadcast %cst_5 : f32 to vector<8x64xf32>
    %7 = arith.maximumf %5, %6 : vector<8x64xf32>
    %c0_6 = arith.constant 0 : index
    %c0_7 = arith.constant 0 : index
    %8 = vector.load %arg4[%c0_6, %c0_7] : memref<64x4xf32, #tpu.memory_space<vmem>>, vector<64x4xf32>
    %cst_8 = arith.constant dense<0.000000e+00> : vector<8x4xf32>
    %9 = tpu.matmul %7, %8, %cst_8 {dimension_numbers = #tpu.dot_dimension_numbers<[1], [0], [0], [1], [0, 0, 1, 1], [], []>} : vector<8x64xf32>, vector<64x4xf32>, vector<8x4xf32> -> vector<8x4xf32>
    %c0_9 = arith.constant 0 : index
    %c0_10 = arith.constant 0 : index
    %10 = vector.load %arg5[%c0_9, %c0_10] : memref<1x4xf32, #tpu.memory_space<vmem>>, vector<1x4xf32>
    %11 = vector.broadcast %10 : vector<1x4xf32> to vector<8x4xf32>
    %12 = arith.addf %9, %11 : vector<8x4xf32>
    %c0_11 = arith.constant 0 : index
    %c0_12 = arith.constant 0 : index
    %13 = vector.load %arg8[%c0_11, %c0_12] : memref<8x4xf32, #tpu.memory_space<vmem>>, vector<8x4xf32>
    tpu.vector_store %arg8[%c0_11, %c0_12], %12 {strides = array<i32>} : memref<8x4xf32, #tpu.memory_space<vmem>>, vector<8x4xf32>,
    %c0_13 = arith.constant 0 : index
    %c0_14 = arith.constant 0 : index
    %14 = vector.load %arg6[%c0_13, %c0_14] : memref<64x4xf32, #tpu.memory_space<vmem>>, vector<64x4xf32>
    %cst_15 = arith.constant dense<0.000000e+00> : vector<8x4xf32>
    %15 = tpu.matmul %7, %14, %cst_15 {dimension_numbers = #tpu.dot_dimension_numbers<[1], [0], [0], [1], [0, 0, 1, 1], [], []>} : vector<8x64xf32>, vector<64x4xf32>, vector<8x4xf32> -> vector<8x4xf32>
    %c0_16 = arith.constant 0 : index
    %c0_17 = arith.constant 0 : index
    %16 = vector.load %arg7[%c0_16, %c0_17] : memref<1x4xf32, #tpu.memory_space<vmem>>, vector<1x4xf32>
    %17 = vector.broadcast %16 : vector<1x4xf32> to vector<8x4xf32>
    %18 = arith.addf %15, %17 : vector<8x4xf32>
    %c0_18 = arith.constant 0 : index
    %c0_19 = arith.constant 0 : index
    %19 = vector.load %arg9[%c0_18, %c0_19] : memref<8x4xf32, #tpu.memory_space<vmem>>, vector<8x4xf32>
    tpu.vector_store %arg9[%c0_18, %c0_19], %18 {strides = array<i32>} : memref<8x4xf32, #tpu.memory_space<vmem>>, vector<8x4xf32>,
    return
  }
  func.func @transform_0(%arg0: i32) -> (i32, i32) {
    %c0_i32 = arith.constant 0 : i32
    %c0_i32_0 = arith.constant 0 : i32
    return %arg0, %c0_i32 : i32, i32
  }
  func.func @transform_1(%arg0: i32) -> (i32, i32) {
    %c0_i32 = arith.constant 0 : i32
    %c0_i32_0 = arith.constant 0 : i32
    %c0_i32_1 = arith.constant 0 : i32
    return %c0_i32, %c0_i32_0 : i32, i32
  }
  func.func @transform_2(%arg0: i32) -> (i32, i32) {
    %c0_i32 = arith.constant 0 : i32
    %c0_i32_0 = arith.constant 0 : i32
    %c0_i32_1 = arith.constant 0 : i32
    return %c0_i32, %c0_i32_0 : i32, i32
  }
  func.func @transform_3(%arg0: i32) -> (i32, i32) {
    %c0_i32 = arith.constant 0 : i32
    %c0_i32_0 = arith.constant 0 : i32
    %c0_i32_1 = arith.constant 0 : i32
    return %c0_i32, %c0_i32_0 : i32, i32
  }
  func.func @transform_4(%arg0: i32) -> (i32, i32) {
    %c0_i32 = arith.constant 0 : i32
    %c0_i32_0 = arith.constant 0 : i32
    %c0_i32_1 = arith.constant 0 : i32
    return %c0_i32, %c0_i32_0 : i32, i32
  }
  func.func @transform_5(%arg0: i32) -> (i32, i32) {
    %c0_i32 = arith.constant 0 : i32
    %c0_i32_0 = arith.constant 0 : i32
    %c0_i32_1 = arith.constant 0 : i32
    return %c0_i32, %c0_i32_0 : i32, i32
  }
  func.func @transform_6(%arg0: i32) -> (i32, i32) {
    %c0_i32 = arith.constant 0 : i32
    %c0_i32_0 = arith.constant 0 : i32
    %c0_i32_1 = arith.constant 0 : i32
    return %c0_i32, %c0_i32_0 : i32, i32
  }
  func.func @transform_7(%arg0: i32) -> (i32, i32) {
    %c0_i32 = arith.constant 0 : i32
    %c0_i32_0 = arith.constant 0 : i32
    return %arg0, %c0_i32 : i32, i32
  }
  func.func @transform_8(%arg0: i32) -> (i32, i32) {
    %c0_i32 = arith.constant 0 : i32
    %c0_i32_0 = arith.constant 0 : i32
    return %arg0, %c0_i32 : i32, i32
  }
}

</mosaic_0001>

<llo_original>
// kernel: tpu_custom_call.1
$region0: #{tpu_custom_call.1}
  #allocation0 [shape = 'u32[]', space=smem, size = 0x4, offset = 0x4, fixed_abs, tag = 'smem constant byte address 0x4 - core index']
  #allocation1 [shape = 'u32[72,128]{1,0:T(1,128)}', space=vmem, size = 0x9000, scoped, tag = 'internal scratch']
  %s0 = inlined_call_operand.vmem [shape: f32[8,8], index: 0, kind: input, shape index: {}]
  %s1 = inlined_call_operand.vmem [shape: f32[8,64], index: 1, kind: input, shape index: {}]
  %s2 = inlined_call_operand.vmem [shape: f32[1,64], index: 2, kind: input, shape index: {}]
  %s3 = inlined_call_operand.vmem [shape: f32[64,4], index: 3, kind: input, shape index: {}]
  %s4 = inlined_call_operand.vmem [shape: f32[1,4], index: 4, kind: input, shape index: {}]
  %s5 = inlined_call_operand.vmem [shape: f32[64,4], index: 5, kind: input, shape index: {}]
  %s6 = inlined_call_operand.vmem [shape: f32[1,4], index: 6, kind: input, shape index: {}]
  %s7 = inlined_call_operand.vmem [shape: f32[8,4], index: 7, kind: output, shape index: {0}]
  %s8 = inlined_call_operand.vmem [shape: f32[8,4], index: 8, kind: output, shape index: {1}]
  %9 = xla_tuple %s7, %s8
  %s10 = sld [smem:[#allocation0]]
  $region46: #{tpu_custom_call.1} parent=0
    _
  %s12 = ssub.s32 1, %s10
  %s13 = scalar_select 0, %s12, %s10
  // Predicated region
  $region2: #{tpu_custom_call.1} parent=0 // pred_check
    _
  $region3: #{tpu_custom_call.1} parent=0 // pred_check_branch
    %15 = sbr.rel (0) target = $region5
  $region4: #{tpu_custom_call.1} parent=0 // pred_region
    _
  $region5: #{tpu_custom_call.1} parent=0 // pred_fallthru
    _
  // Predicated region
  $region6: #{tpu_custom_call.1} parent=0 // pred_check
    _
  $region7: #{tpu_custom_call.1} parent=0 // pred_check_branch
    %17 = sbr.rel (0) target = $region9
  $region8: #{tpu_custom_call.1} parent=0 // pred_region
    _
  $region9: #{tpu_custom_call.1} parent=0 // pred_fallthru
    _
  // Predicated region
  $region10: #{tpu_custom_call.1} parent=0 // pred_check
    _
  $region11: #{tpu_custom_call.1} parent=0 // pred_check_branch
    %19 = sbr.rel (0) target = $region13
  $region12: #{tpu_custom_call.1} parent=0 // pred_region
    _
  $region13: #{tpu_custom_call.1} parent=0 // pred_fallthru
    _
  // Predicated region
  $region14: #{tpu_custom_call.1} parent=0 // pred_check
    _
  $region15: #{tpu_custom_call.1} parent=0 // pred_check_branch
    %21 = sbr.rel (0) target = $region17
  $region16: #{tpu_custom_call.1} parent=0 // pred_region
    _
  $region17: #{tpu_custom_call.1} parent=0 // pred_fallthru
    _
  // Predicated region
  $region18: #{tpu_custom_call.1} parent=0 // pred_check
    _
  $region19: #{tpu_custom_call.1} parent=0 // pred_check_branch
    %23 = sbr.rel (0) target = $region21
  $region20: #{tpu_custom_call.1} parent=0 // pred_region
    _
  $region21: #{tpu_custom_call.1} parent=0 // pred_fallthru
    _
  // Predicated region
  $region22: #{tpu_custom_call.1} parent=0 // pred_check
    _
  $region23: #{tpu_custom_call.1} parent=0 // pred_check_branch
    %25 = sbr.rel (0) target = $region25
  $region24: #{tpu_custom_call.1} parent=0 // pred_region
    _
  $region25: #{tpu_custom_call.1} parent=0 // pred_fallthru
    _
  // Predicated region
  $region26: #{tpu_custom_call.1} parent=0 // pred_check
    _
  $region27: #{tpu_custom_call.1} parent=0 // pred_check_branch
    %27 = sbr.rel (0) target = $region29
  $region28: #{tpu_custom_call.1} parent=0 // pred_region
    _
  $region29: #{tpu_custom_call.1} parent=0 // pred_fallthru
    _
  %v28 = vld [vmem:[%s0] sm:$0xff]
  %v29 = vld [vmem:[%s1] sm:$0xff]
  %v30 = vld [vmem:[%s2] sm:$0x1]
  %v32 = vperm.slane %v30, 0
  %vm34 = vcmask 64512
  %v36 = vsel %vm34, %v28, 0
  %38 = vmatpush.msra.mxu0 0.0
  %39 = vmatpush.msra.mxu0 0.0
  %40 = vmatpush.msra.mxu0 0.0
  %41 = vmatpush.msra.mxu0 0.0
  %42 = vmatpush.msra.mxu0 0.0
  %43 = vmatpush.msra.mxu0 0.0
  %44 = vmatpush.msra.mxu0 0.0
  %45 = vmatpush.msra.mxu0 0.0
  %46 = vmatpush.msra.mxu0 0.0
  %47 = vmatpush.msra.mxu0 0.0
  %48 = vmatpush.msra.mxu0 0.0
  %49 = vmatpush.msra.mxu0 0.0
  %50 = vmatpush.msra.mxu0 0.0
  %51 = vmatpush.msra.mxu0 0.0
  %52 = vmatpush.msra.mxu0 0.0
  %53 = vmatpush.msra.mxu0 %v29
  %54 = vmatmul.f32.gmra.mxu0 %v36
  %v55 = vpop.f32.mrf.mxu0
  %v56 = vadd.f32 %v32, %v55
  %57 = vdwg.mxu0
  %v58 = vmax.f32 %v56, 0.0
  %v59 = vld [vmem:[%s3] sm:$0xff]
  %v60 = vld [vmem:[%s3 + $0x8] sm:$0xff]
  %v61 = vld [vmem:[%s3 + $0x10] sm:$0xff]
  %v62 = vld [vmem:[%s3 + $0x18] sm:$0xff]
  %v63 = vld [vmem:[%s3 + $0x20] sm:$0xff]
  %v64 = vld [vmem:[%s3 + $0x28] sm:$0xff]
  %v65 = vld [vmem:[%s3 + $0x30] sm:$0xff]
  %v66 = vld [vmem:[%s3 + $0x38] sm:$0xff]
  %v67 = vld [vmem:[%s4] sm:$0x1]
  %v69 = vperm.slane %v67, 0
  %vm71 = vcmask 523264
  %v73 = vsel %vm71, %v58, 0
  %75 = vmatpush.msra.mxu0 0.0
  %76 = vmatpush.msra.mxu0 0.0
  %77 = vmatpush.msra.mxu0 0.0
  %78 = vmatpush.msra.mxu0 0.0
  %79 = vmatpush.msra.mxu0 0.0
  %80 = vmatpush.msra.mxu0 0.0
  %81 = vmatpush.msra.mxu0 0.0
  %82 = vmatpush.msra.mxu0 0.0
  %83 = vmatpush.msra.mxu0 %v66
  %84 = vmatpush.msra.mxu0 %v65
  %85 = vmatpush.msra.mxu0 %v64
  %86 = vmatpush.msra.mxu0 %v63
  %87 = vmatpush.msra.mxu0 %v62
  %88 = vmatpush.msra.mxu0 %v61
  %89 = vmatpush.msra.mxu0 %v60
  %90 = vmatpush.msra.mxu0 %v59
  %91 = vmatmul.f32.gmra.mxu0 %v73
  %v92 = vpop.f32.mrf.mxu0
  %v93 = vadd.f32 %v69, %v92
  %94 = vdwg.mxu0
  %vm95 = vcmask 31744
  %96 = vst.msk [vmem:[%s7] sm:$0xff] %vm95, %v93
  %v97 = vld [vmem:[%s5] sm:$0xff]
  %v98 = vld [vmem:[%s5 + $0x8] sm:$0xff]
  %v99 = vld [vmem:[%s5 + $0x10] sm:$0xff]
  %v100 = vld [vmem:[%s5 + $0x18] sm:$0xff]
  %v101 = vld [vmem:[%s5 + $0x20] sm:$0xff]
  %v102 = vld [vmem:[%s5 + $0x28] sm:$0xff]
  %v103 = vld [vmem:[%s5 + $0x30] sm:$0xff]
  %v104 = vld [vmem:[%s5 + $0x38] sm:$0xff]
  %v105 = vld [vmem:[%s6] sm:$0x1]
  %v107 = vperm.slane %v105, 0
  %109 = vmatpush.msra.mxu0 0.0
  %110 = vmatpush.msra.mxu0 0.0
  %111 = vmatpush.msra.mxu0 0.0
  %112 = vmatpush.msra.mxu0 0.0
  %113 = vmatpush.msra.mxu0 0.0
  %114 = vmatpush.msra.mxu0 0.0
  %115 = vmatpush.msra.mxu0 0.0
  %116 = vmatpush.msra.mxu0 0.0
  %117 = vmatpush.msra.mxu0 %v104
  %118 = vmatpush.msra.mxu0 %v103
  %119 = vmatpush.msra.mxu0 %v102
  %120 = vmatpush.msra.mxu0 %v101
  %121 = vmatpush.msra.mxu0 %v100
  %122 = vmatpush.msra.mxu0 %v99
  %123 = vmatpush.msra.mxu0 %v98
  %124 = vmatpush.msra.mxu0 %v97
  %125 = vmatmul.f32.gmra.mxu0 %v73
  %v126 = vpop.f32.mrf.mxu0
  %v127 = vadd.f32 %v107, %v126
  %128 = vdwg.mxu0
  %129 = vst.msk [vmem:[%s8] sm:$0xff] %vm95, %v127
  // Predicated region
  $region30: #{tpu_custom_call.1} parent=0 // pred_check
    _
  $region31: #{tpu_custom_call.1} parent=0 // pred_check_branch
    %131 = sbr.rel (0) target = $region33
  $region32: #{tpu_custom_call.1} parent=0 // pred_region
    _
  $region33: #{tpu_custom_call.1} parent=0 // pred_fallthru
    _
  // Predicated region
  $region34: #{tpu_custom_call.1} parent=0 // pred_check
    _
  $region35: #{tpu_custom_call.1} parent=0 // pred_check_branch
    %133 = sbr.rel (0) target = $region37
  $region36: #{tpu_custom_call.1} parent=0 // pred_region
    _
  $region37: #{tpu_custom_call.1} parent=0 // pred_fallthru
    _
  // Predicated region
  $region38: #{tpu_custom_call.1} parent=0 // pred_check
    _
  $region39: #{tpu_custom_call.1} parent=0 // pred_check_branch
    %135 = sbr.rel (0) target = $region41
  $region40: #{tpu_custom_call.1} parent=0 // pred_region
    _
  $region41: #{tpu_custom_call.1} parent=0 // pred_fallthru
    _
  // Predicated region
  $region42: #{tpu_custom_call.1} parent=0 // pred_check
    _
  $region43: #{tpu_custom_call.1} parent=0 // pred_check_branch
    %137 = sbr.rel (0) target = $region45
  $region44: #{tpu_custom_call.1} parent=0 // pred_region
    _
  $region45: #{tpu_custom_call.1} parent=0 // pred_fallthru
    _

</llo_original>
